<compile_context>
chip_gen: v6e
topology: v6e:2x2x1
jax: 0.10.0
libtpu: 0.0.40
codegen_flags: <defaults>
</compile_context>

<pallas_src>
import jax
import jax.numpy as jnp
from jax.experimental import pallas as pl
from jax.experimental.pallas import tpu as pltpu

MAX_TM = 1024        # max rows per tile of the lane-dense slab (2 MiB @ L=512 f32)
NUM_CORES = 2        # v7x megacore split; harmless sequential outer loop on v5e/v6e
_LANE_CANDIDATES = (512, 256, 128)


def _round_up(x, m):
    return ((x + m - 1) // m) * m


def _choose_lanes(n_elem):
    for lanes in _LANE_CANDIDATES:
        if n_elem % lanes == 0:
            return lanes
    return 128  # rare fallback: needs a small zero pad (diff == 0, harmless)


def _to_slab(x, rows, lanes):
    flat = x.reshape(-1)
    pad = rows * lanes - flat.shape[0]
    if pad:
        flat = jnp.pad(flat, (0, pad))
    return flat.reshape(rows, lanes)


def _make_kernel(n_preds, tm, lanes, rows, tiles_per_core, needs_mask):
    def kernel(*refs):
        gt_ref = refs[0]
        pred_refs = refs[1:1 + n_preds]
        out_ref = refs[1 + n_preds]

        c = pl.program_id(0)   # core-split axis (parallel)
        i = pl.program_id(1)   # row-tile axis   (arbitrary / reduction)

        @pl.when(i == 0)
        def _():
            out_ref[...] = jnp.zeros_like(out_ref)

        gt = gt_ref[...].astype(jnp.float32)

        if needs_mask:
            row_start = (c * tiles_per_core + i) * tm
            row_ids = (jax.lax.broadcasted_iota(jnp.int32, (tm, lanes), 0)
                       + row_start)
            valid = row_ids < rows

        for p in range(n_preds):
            d = pred_refs[p][...].astype(jnp.float32) - gt
            if needs_mask:
                d = jnp.where(valid, d, 0.0)
            d2 = d * d
            # Fold sublane groups elementwise (pure VPU adds); the cross-lane
            # reduce happens only once, in the JAX wrapper.
            out_ref[0, p] += jnp.sum(d2.reshape(tm // 8, 8, lanes), axis=0)

    return kernel


def _fused_sq_err_sums(gt, preds):
    """float32 vector of sum((pred_k - gt)^2) for each pred, reading every
    input exactly once in a single fused, lane-dense Pallas pass."""
    n_preds = len(preds)
    for p in preds:
        assert p.shape == gt.shape, (p.shape, gt.shape)
    n_elem = gt.size

    lanes = _choose_lanes(n_elem)
    rows = -(-n_elem // lanes)
    tm = min(MAX_TM, _round_up(rows, 8))
    n_row_blocks = -(-rows // tm)
    tiles_per_core = -(-n_row_blocks // NUM_CORES)
    needs_mask = (NUM_CORES * tiles_per_core * tm != rows)

    gt_slab = _to_slab(gt, rows, lanes)
    pred_slabs = [_to_slab(p, rows, lanes) for p in preds]

    def in_map(c, i):
        blk = c * tiles_per_core + i
        # Clamp: out-of-range tiles (odd core split / ragged tail) re-read a
        # valid block and are fully zeroed by the in-kernel row mask.
        return (jnp.minimum(blk, n_row_blocks - 1), 0)

    kernel = _make_kernel(n_preds, tm, lanes, rows, tiles_per_core, needs_mask)

    bytes_accessed = ((n_preds + 1) * rows * lanes * 4
                      + NUM_CORES * n_preds * 8 * lanes * 4)
    flops = 3 * n_preds * rows * lanes

    partials = pl.pallas_call(
        kernel,
        out_shape=jax.ShapeDtypeStruct((NUM_CORES, n_preds, 8, lanes),
                                       jnp.float32),
        grid_spec=pltpu.PrefetchScalarGridSpec(
            num_scalar_prefetch=0,
            grid=(NUM_CORES, tiles_per_core),
            in_specs=[pl.BlockSpec((tm, lanes), in_map)
                      for _ in range(n_preds + 1)],
            out_specs=pl.BlockSpec((1, n_preds, 8, lanes),
                                   lambda c, i: (c, 0, 0, 0)),
        ),
        compiler_params=pltpu.CompilerParams(
            dimension_semantics=("parallel", "arbitrary"),
            vmem_limit_bytes=32 * 1024 * 1024,
        ),
        cost_estimate=pl.CostEstimate(flops=flops, transcendentals=0,
                                      bytes_accessed=bytes_accessed),
    )(gt_slab, *pred_slabs)

    return jnp.sum(partials, axis=(0, 2, 3))  # (n_preds,)


class BlendingLoss:
    """JAX/Pallas port of loss/blendingloss.py::BlendingLoss (MSE loss_type)."""

    def __init__(self, loss_weights=None):
        if loss_weights is None:
            loss_weights = {'warping': 1.0}
        self.loss_weights = loss_weights
        # TODO(synk): 'vgg' perceptual loss requires pretrained VGG features; not implemented.

    def get_loss_weights(self):
        return self.loss_weights

    def __call__(self, net_out, gt_buffers):
        loss_dict = {}
        gt = gt_buffers['reference_img']

        names, preds = [], []
        if 'reconst' in self.loss_weights:
            names.append('reconst')
            preds.append(net_out['out_img'])
        if 'warping' in self.loss_weights:
            names.append('warp_l')
            preds.append(net_out['out_l'])
            names.append('warp_r')
            preds.append(net_out['out_r'])

        if preds:
            sums = _fused_sq_err_sums(gt, preds)       # one pass over HBM
            inv_n = 1.0 / jnp.float32(gt.size)
            mse = {name: sums[k] * inv_n for k, name in enumerate(names)}
            if 'reconst' in self.loss_weights:
                loss_dict['reconst'] = mse['reconst']
            if 'warping' in self.loss_weights:
                loss_dict['warping'] = (mse['warp_l'] + mse['warp_r']) / 2.0
        return loss_dict


if __name__ == "__main__":
    key = jax.random.PRNGKey(0)
    k1, k2, k3, k4 = jax.random.split(key, 4)

    # Test 1: lane-aligned NCHW images, fused reconst + warping.
    N, C, H, W = 2, 3, 16, 16
    ref_img = jax.random.normal(k1, (N, C, H, W), dtype=jnp.float32)
    out_l = jax.random.normal(k2, (N, C, H, W), dtype=jnp.float32)
    out_r = jax.random.normal(k3, (N, C, H, W), dtype=jnp.float32)
    out_img = jax.random.normal(k4, (N, C, H, W), dtype=jnp.float32)

    net_out = {'out_img': out_img, 'out_l': out_l, 'out_r': out_r}
    gt_buffers = {'reference_img': ref_img}

    loss_mod = BlendingLoss(loss_weights={'reconst': 1.0, 'warping': 1.0})
    losses = loss_mod(net_out, gt_buffers)
    losses = jax.block_until_ready(losses)

    ref_reconst = jnp.mean((out_img - ref_img) ** 2)
    ref_warping = (jnp.mean((out_l - ref_img) ** 2)
                   + jnp.mean((out_r - ref_img) ** 2)) / 2.0
    assert jnp.allclose(losses['reconst'], ref_reconst, rtol=1e-5, atol=1e-6)
    assert jnp.allclose(losses['warping'], ref_warping, rtol=1e-5, atol=1e-6)

    # Test 2: ragged shape (element count not a multiple of 128) exercises the
    # in-kernel mask + tail-pad fallback and the warping-only path.
    N2, C2, H2, W2 = 2, 3, 17, 24
    g2 = jax.random.normal(k1, (N2, C2, H2, W2), dtype=jnp.float32)
    a2 = jax.random.normal(k2, (N2, C2, H2, W2), dtype=jnp.float32)
    b2 = jax.random.normal(k3, (N2, C2, H2, W2), dtype=jnp.float32)
    loss2 = BlendingLoss(loss_weights={'warping': 1.0})(
        {'out_img': a2, 'out_l': a2, 'out_r': b2}, {'reference_img': g2})
    loss2 = jax.block_until_ready(loss2)
    ref2 = (jnp.mean((a2 - g2) ** 2) + jnp.mean((b2 - g2) ** 2)) / 2.0
    assert jnp.allclose(loss2['warping'], ref2, rtol=1e-5, atol=1e-6)

    print("KERNEL_OK")
</pallas_src>

<mosaic_0001>
module attributes {stable_mosaic.version = 11 : i64} {
  func.func @kernel(%arg0: i32, %arg1: i32, %arg2: memref<8x512xf32, #tpu.memory_space<vmem>>, %arg3: memref<8x512xf32, #tpu.memory_space<vmem>>, %arg4: memref<8x512xf32, #tpu.memory_space<vmem>>, %arg5: memref<8x512xf32, #tpu.memory_space<vmem>>, %arg6: memref<1x3x8x512xf32, #tpu.memory_space<vmem>>) attributes {dimension_semantics = [#tpu.dimension_semantics<parallel>, #tpu.dimension_semantics<arbitrary>], iteration_bounds = array<i64: 2, 1>, scalar_prefetch = 0 : i64, scratch_operands = 0 : i64, tpu.core_type = #tpu.core_type<tc>, window_params = [{transform_indices = @transform_0, window_bounds = array<i64: 8, 512>}, {transform_indices = @transform_1, window_bounds = array<i64: 8, 512>}, {transform_indices = @transform_2, window_bounds = array<i64: 8, 512>}, {transform_indices = @transform_3, window_bounds = array<i64: 8, 512>}, {transform_indices = @transform_4, window_bounds = array<i64: 1, 3, 8, 512>}]} {
    %c0_i32 = arith.constant 0 : i32
    %0 = arith.cmpi eq, %arg1, %c0_i32 : i32
    %1 = arith.extui %0 : i1 to i32
    %c0_i32_0 = arith.constant 0 : i32
    %2 = arith.cmpi ne, %1, %c0_i32_0 : i32
    scf.if %2 {
      %cst_35 = arith.constant 0.000000e+00 : f32
      %51 = vector.broadcast %cst_35 : f32 to vector<1x3x8x512xf32>
      %c0_36 = arith.constant 0 : index
      %c0_37 = arith.constant 0 : index
      %c0_38 = arith.constant 0 : index
      %c0_39 = arith.constant 0 : index
      %52 = vector.load %arg6[%c0_36, %c0_37, %c0_38, %c0_39] : memref<1x3x8x512xf32, #tpu.memory_space<vmem>>, vector<1x3x8x512xf32>
      tpu.vector_store %arg6[%c0_36, %c0_37, %c0_38, %c0_39], %51 {strides = array<i32>} : memref<1x3x8x512xf32, #tpu.memory_space<vmem>>, vector<1x3x8x512xf32>,
    } else {
    }
    %c0 = arith.constant 0 : index
    %c0_1 = arith.constant 0 : index
    %3 = vector.load %arg2[%c0, %c0_1] : memref<8x512xf32, #tpu.memory_space<vmem>>, vector<8x512xf32>
    %c1_i32 = arith.constant 1 : i32
    %4 = arith.muli %arg0, %c1_i32 : i32
    %5 = arith.addi %4, %arg1 : i32
    %c8_i32 = arith.constant 8 : i32
    %6 = arith.muli %5, %c8_i32 : i32
    %7 = tpu.iota {dimensions = array<i32: 0>} : vector<8x512xi32>
    %8 = vector.broadcast %6 : i32 to vector<8x512xi32>
    %9 = arith.addi %7, %8 : vector<8x512xi32>
    %c3_i32 = arith.constant 3 : i32
    %10 = vector.broadcast %c3_i32 : i32 to vector<8x512xi32>
    %11 = arith.cmpi slt, %9, %10 : vector<8x512xi32>
    %c0_2 = arith.constant 0 : index
    %c0_3 = arith.constant 0 : index
    %12 = vector.load %arg3[%c0_2, %c0_3] : memref<8x512xf32, #tpu.memory_space<vmem>>, vector<8x512xf32>
    %13 = arith.subf %12, %3 : vector<8x512xf32>
    %cst = arith.constant 0.000000e+00 : f32
    %14 = vector.broadcast %cst : f32 to vector<8x512xf32>
    %15 = arith.select %11, %13, %14 : vector<8x512xi1>, vector<8x512xf32>
    %16 = arith.mulf %15, %15 : vector<8x512xf32>
    %c0_4 = arith.constant 0 : index
    %c0_5 = arith.constant 0 : index
    %c0_6 = arith.constant 0 : index
    %c0_7 = arith.constant 0 : index
    %17 = vector.load %arg6[%c0_4, %c0_5, %c0_6, %c0_7] : memref<1x3x8x512xf32, #tpu.memory_space<vmem>>, vector<1x1x8x512xf32>
    %18 = vector.shape_cast %17 : vector<1x1x8x512xf32> to vector<8x512xf32>
    %19 = vector.shape_cast %16 : vector<8x512xf32> to vector<1x8x512xf32>
    %cst_8 = arith.constant dense<0.000000e+00> : vector<8x512xf32>
    %20 = vector.multi_reduction <add>, %19, %cst_8 [0] : vector<1x8x512xf32> to vector<8x512xf32>
    %21 = arith.addf %18, %20 : vector<8x512xf32>
    %c0_9 = arith.constant 0 : index
    %c0_10 = arith.constant 0 : index
    %c0_11 = arith.constant 0 : index
    %c0_12 = arith.constant 0 : index
    %22 = vector.load %arg6[%c0_9, %c0_10, %c0_11, %c0_12] : memref<1x3x8x512xf32, #tpu.memory_space<vmem>>, vector<1x1x8x512xf32>
    %23 = vector.shape_cast %22 : vector<1x1x8x512xf32> to vector<8x512xf32>
    %24 = vector.shape_cast %21 : vector<8x512xf32> to vector<1x1x8x512xf32>
    tpu.vector_store %arg6[%c0_9, %c0_10, %c0_11, %c0_12], %24 {strides = array<i32>} : memref<1x3x8x512xf32, #tpu.memory_space<vmem>>, vector<1x1x8x512xf32>,
    %c0_13 = arith.constant 0 : index
    %c0_14 = arith.constant 0 : index
    %25 = vector.load %arg4[%c0_13, %c0_14] : memref<8x512xf32, #tpu.memory_space<vmem>>, vector<8x512xf32>
    %26 = arith.subf %25, %3 : vector<8x512xf32>
    %cst_15 = arith.constant 0.000000e+00 : f32
    %27 = vector.broadcast %cst_15 : f32 to vector<8x512xf32>
    %28 = arith.select %11, %26, %27 : vector<8x512xi1>, vector<8x512xf32>
    %29 = arith.mulf %28, %28 : vector<8x512xf32>
    %c0_16 = arith.constant 0 : index
    %c1 = arith.constant 1 : index
    %c0_17 = arith.constant 0 : index
    %c0_18 = arith.constant 0 : index
    %30 = vector.load %arg6[%c0_16, %c1, %c0_17, %c0_18] : memref<1x3x8x512xf32, #tpu.memory_space<vmem>>, vector<1x1x8x512xf32>
    %31 = vector.shape_cast %30 : vector<1x1x8x512xf32> to vector<8x512xf32>
    %32 = vector.shape_cast %29 : vector<8x512xf32> to vector<1x8x512xf32>
    %cst_19 = arith.constant dense<0.000000e+00> : vector<8x512xf32>
    %33 = vector.multi_reduction <add>, %32, %cst_19 [0] : vector<1x8x512xf32> to vector<8x512xf32>
    %34 = arith.addf %31, %33 : vector<8x512xf32>
    %c0_20 = arith.constant 0 : index
    %c1_21 = arith.constant 1 : index
    %c0_22 = arith.constant 0 : index
    %c0_23 = arith.constant 0 : index
    %35 = vector.load %arg6[%c0_20, %c1_21, %c0_22, %c0_23] : memref<1x3x8x512xf32, #tpu.memory_space<vmem>>, vector<1x1x8x512xf32>
    %36 = vector.shape_cast %35 : vector<1x1x8x512xf32> to vector<8x512xf32>
    %37 = vector.shape_cast %34 : vector<8x512xf32> to vector<1x1x8x512xf32>
    tpu.vector_store %arg6[%c0_20, %c1_21, %c0_22, %c0_23], %37 {strides = array<i32>} : memref<1x3x8x512xf32, #tpu.memory_space<vmem>>, vector<1x1x8x512xf32>,
    %c0_24 = arith.constant 0 : index
    %c0_25 = arith.constant 0 : index
    %38 = vector.load %arg5[%c0_24, %c0_25] : memref<8x512xf32, #tpu.memory_space<vmem>>, vector<8x512xf32>
    %39 = arith.subf %38, %3 : vector<8x512xf32>
    %cst_26 = arith.constant 0.000000e+00 : f32
    %40 = vector.broadcast %cst_26 : f32 to vector<8x512xf32>
    %41 = arith.select %11, %39, %40 : vector<8x512xi1>, vector<8x512xf32>
    %42 = arith.mulf %41, %41 : vector<8x512xf32>
    %c0_27 = arith.constant 0 : index
    %c2 = arith.constant 2 : index
    %c0_28 = arith.constant 0 : index
    %c0_29 = arith.constant 0 : index
    %43 = vector.load %arg6[%c0_27, %c2, %c0_28, %c0_29] : memref<1x3x8x512xf32, #tpu.memory_space<vmem>>, vector<1x1x8x512xf32>
    %44 = vector.shape_cast %43 : vector<1x1x8x512xf32> to vector<8x512xf32>
    %45 = vector.shape_cast %42 : vector<8x512xf32> to vector<1x8x512xf32>
    %cst_30 = arith.constant dense<0.000000e+00> : vector<8x512xf32>
    %46 = vector.multi_reduction <add>, %45, %cst_30 [0] : vector<1x8x512xf32> to vector<8x512xf32>
    %47 = arith.addf %44, %46 : vector<8x512xf32>
    %c0_31 = arith.constant 0 : index
    %c2_32 = arith.constant 2 : index
    %c0_33 = arith.constant 0 : index
    %c0_34 = arith.constant 0 : index
    %48 = vector.load %arg6[%c0_31, %c2_32, %c0_33, %c0_34] : memref<1x3x8x512xf32, #tpu.memory_space<vmem>>, vector<1x1x8x512xf32>
    %49 = vector.shape_cast %48 : vector<1x1x8x512xf32> to vector<8x512xf32>
    %50 = vector.shape_cast %47 : vector<8x512xf32> to vector<1x1x8x512xf32>
    tpu.vector_store %arg6[%c0_31, %c2_32, %c0_33, %c0_34], %50 {strides = array<i32>} : memref<1x3x8x512xf32, #tpu.memory_space<vmem>>, vector<1x1x8x512xf32>,
    return
  }
  func.func @transform_0(%arg0: i32, %arg1: i32) -> (i32, i32) {
    %c1_i32 = arith.constant 1 : i32
    %0 = arith.muli %arg0, %c1_i32 : i32
    %1 = arith.addi %0, %arg1 : i32
    %c0_i32 = arith.constant 0 : i32
    %2 = arith.minsi %1, %c0_i32 : i32
    %c0_i32_0 = arith.constant 0 : i32
    %c0_i32_1 = arith.constant 0 : i32
    return %2, %c0_i32_0 : i32, i32
  }
  func.func @transform_1(%arg0: i32, %arg1: i32) -> (i32, i32) {
    %c1_i32 = arith.constant 1 : i32
    %0 = arith.muli %arg0, %c1_i32 : i32
    %1 = arith.addi %0, %arg1 : i32
    %c0_i32 = arith.constant 0 : i32
    %2 = arith.minsi %1, %c0_i32 : i32
    %c0_i32_0 = arith.constant 0 : i32
    %c0_i32_1 = arith.constant 0 : i32
    return %2, %c0_i32_0 : i32, i32
  }
  func.func @transform_2(%arg0: i32, %arg1: i32) -> (i32, i32) {
    %c1_i32 = arith.constant 1 : i32
    %0 = arith.muli %arg0, %c1_i32 : i32
    %1 = arith.addi %0, %arg1 : i32
    %c0_i32 = arith.constant 0 : i32
    %2 = arith.minsi %1, %c0_i32 : i32
    %c0_i32_0 = arith.constant 0 : i32
    %c0_i32_1 = arith.constant 0 : i32
    return %2, %c0_i32_0 : i32, i32
  }
  func.func @transform_3(%arg0: i32, %arg1: i32) -> (i32, i32) {
    %c1_i32 = arith.constant 1 : i32
    %0 = arith.muli %arg0, %c1_i32 : i32
    %1 = arith.addi %0, %arg1 : i32
    %c0_i32 = arith.constant 0 : i32
    %2 = arith.minsi %1, %c0_i32 : i32
    %c0_i32_0 = arith.constant 0 : i32
    %c0_i32_1 = arith.constant 0 : i32
    return %2, %c0_i32_0 : i32, i32
  }
  func.func @transform_4(%arg0: i32, %arg1: i32) -> (i32, i32, i32, i32) {
    %c0_i32 = arith.constant 0 : i32
    %c0_i32_0 = arith.constant 0 : i32
    %c0_i32_1 = arith.constant 0 : i32
    %c0_i32_2 = arith.constant 0 : i32
    return %arg0, %c0_i32, %c0_i32_0, %c0_i32_1 : i32, i32, i32, i32
  }
}

</mosaic_0001>

<llo_original>
// kernel: tpu_custom_call.1
$region0: #{tpu_custom_call.1}
  #allocation0 [shape = 'u32[]', space=smem, size = 0x4, offset = 0x4, fixed_abs, tag = 'smem constant byte address 0x4 - core index']
  #allocation1 [shape = 'u32[144,128]{1,0:T(1,128)}', space=vmem, size = 0x12000, scoped, tag = 'internal scratch']
  %s0 = inlined_call_operand.hbm [shape: f32[3,512], index: 0, kind: input, shape index: {}]
  %s1 = inlined_call_operand.hbm [shape: f32[3,512], index: 1, kind: input, shape index: {}]
  %s2 = inlined_call_operand.hbm [shape: f32[3,512], index: 2, kind: input, shape index: {}]
  %s3 = inlined_call_operand.hbm [shape: f32[3,512], index: 3, kind: input, shape index: {}]
  %s4 = inlined_call_operand.hbm [shape: f32[2,3,8,512], index: 4, kind: output, shape index: {}]
  %s5 = sld [smem:[#allocation0]]
  $region69: #{tpu_custom_call.1} parent=0
    _
  %s7 = ssub.s32 1, %s5
  %s8 = scalar_select 0, %s7, %s5
  $region1: #{tpu_custom_call.1} parent=0
    #allocation2 [shape = 'u8[32768]{0}', space=vmem, size = 0x8000, scoped, tag = 'input window, operand 0']
    #allocation3 [shape = 's32[2]{0}', space=sflag, size = 0x8, scoped, tag = 'scoped memory for tpu_custom_call.1']
    #allocation4 [shape = 's32[2]{0}', space=sflag, size = 0x8, scoped, tag = 'scoped memory for tpu_custom_call.1']
    #allocation5 [shape = 'u8[32768]{0}', space=vmem, size = 0x8000, scoped, tag = 'input window, operand 1']
    #allocation6 [shape = 's32[2]{0}', space=sflag, size = 0x8, scoped, tag = 'scoped memory for tpu_custom_call.1']
    #allocation7 [shape = 'u8[32768]{0}', space=vmem, size = 0x8000, scoped, tag = 'input window, operand 2']
    #allocation8 [shape = 'u8[32768]{0}', space=vmem, size = 0x8000, scoped, tag = 'input window, operand 3']
    #allocation9 [shape = 's32[2]{0}', space=sflag, size = 0x8, scoped, tag = 'scoped memory for tpu_custom_call.1']
    #allocation10 [shape = 'u8[98304]{0}', space=vmem, size = 0x18000, scoped, tag = 'output window, operand 0']
    %9 = vsyncpa [#allocation3], 0
    %s10 = scalar_lea.sflag [#allocation3], 1
    %11 = vsyncpa %s10, 0
    %12 = vsyncpa [#allocation6], 0
    %s13 = scalar_lea.sflag [#allocation6], 1
    %14 = vsyncpa %s13, 0
    %15 = vsyncpa [#allocation9], 0
    %s16 = scalar_lea.sflag [#allocation9], 1
    %17 = vsyncpa %s16, 0
    %18 = vsyncpa [#allocation4], 0
    %s19 = scalar_lea.sflag [#allocation4], 1
    %20 = vsyncpa %s19, 0
    loop: start=0, step=1, limit=4
    $region2: #{tpu_custom_call.1} parent=1 // loop_pre_header
      _
    $region3: #{tpu_custom_call.1} parent=1 // loop_header
      %s22 = sphi 0, %s26
      %p23 = scmp.ge.s32.totalorder %s22, 4
      %s29 = sphi 0, %s41
      %s30 = sphi 0, %s37
      %s31 = sphi 0, %s29
      %s32 = sphi 0, %s30
      %s33 = sphi 0, %s31
      %s34 = sphi 0, %s32
      %s50 = sphi 0, %s52
      %s53 = sphi 0, %s50
      %s54 = sphi 0, %s53
      %s70 = sphi 0, %s54
      %s82 = sphi 0, %s84
      %s85 = sphi 0, %s82
      %s86 = sphi 0, %s85
      %s102 = sphi 0, %s86
      %s114 = sphi 0, %s116
      %s117 = sphi 0, %s114
      %s118 = sphi 0, %s117
      %s134 = sphi 0, %s118
      %s146 = sphi 0, %s148
      %s149 = sphi 0, %s146
      %s150 = sphi 0, %s149
      %s166 = sphi 0, %s150
      %s172 = sphi 0, %s174
      %s175 = sphi 0, %s172
      %s176 = sphi 0, %s175
      %s192 = sphi 0, %s176
    $region4: #{tpu_custom_call.1} parent=1 // loop_header_branch
      %25 = sbr.rel (%p23) target = $region8
    $region5: #{tpu_custom_call.1} parent=1 // loop_body
      %s27 = ssub.s32 %s22, 1
      %s28 = ssub.s32 %s22, 2
      %s35 = sadd.s32 1, %s30
      %p36 = scmp.ge.s32.totalorder %s35, 1
      %s37 = scalar_select %p36, 0, %s35
      %s38 = sadd.s32 1, %s29
      %s39 = scalar_select %p36, %s38, %s29
      %p40 = scmp.ge.s32.totalorder %s39, 2
      %s41 = scalar_select %p40, 0, %s39
      %s42 = sadd.s32 %s29, %s30
      %p43 = scmp.lt.s32.totalorder %s42, 0
      %s44 = scalar_select %p43, %s42, 0
      %s45 = sadd.s32 %s41, %s37
      %p46 = scmp.lt.s32.totalorder %s45, 0
      %s47 = scalar_select %p46, %s45, 0
      %s48 = ssub.s32 %s44, %s47
      %p49 = scmp.eq.s32.totalorder %s48, 0
      %s51 = sadd.s32 %s50, 1
      %s52 = scalar_select %p49, %s50, %s51
      %p55 = pneg %p49
      %p56 = scmp.eq.s32.totalorder %s22, 1
      %p57 = por %p55, %p56
      %p58 = scmp.ne.s32.totalorder %s50, %s53
      %p59 = scmp.eq.s32.totalorder %s22, 0
      %p60 = por %p58, %p59
      %p61 = scmp.ne.s32.totalorder %s50, %s53
      %p62 = scmp.eq.s32.totalorder %s27, 1
      %p63 = por %p61, %p62
      %p64 = scmp.ne.s32.totalorder %s53, %s54
      %p65 = scmp.eq.s32.totalorder %s27, 0
      %p66 = por %p64, %p65
      %p67 = scmp.ne.s32.totalorder %s53, %s54
      %p68 = scmp.eq.s32.totalorder %s28, 1
      %p69 = por %p67, %p68
      %p71 = scmp.ne.s32.totalorder %s54, %s70
      %p72 = scmp.eq.s32.totalorder %s28, 0
      %p73 = por %p71, %p72
      %s74 = sadd.s32 %s29, %s30
      %p75 = scmp.lt.s32.totalorder %s74, 0
      %s76 = scalar_select %p75, %s74, 0
      %s77 = sadd.s32 %s41, %s37
      %p78 = scmp.lt.s32.totalorder %s77, 0
      %s79 = scalar_select %p78, %s77, 0
      %s80 = ssub.s32 %s76, %s79
      %p81 = scmp.eq.s32.totalorder %s80, 0
      %s83 = sadd.s32 %s82, 1
      %s84 = scalar_select %p81, %s82, %s83
      %p87 = pneg %p81
      %p88 = scmp.eq.s32.totalorder %s22, 1
      %p89 = por %p87, %p88
      %p90 = scmp.ne.s32.totalorder %s82, %s85
      %p91 = scmp.eq.s32.totalorder %s22, 0
      %p92 = por %p90, %p91
      %p93 = scmp.ne.s32.totalorder %s82, %s85
      %p94 = scmp.eq.s32.totalorder %s27, 1
      %p95 = por %p93, %p94
      %p96 = scmp.ne.s32.totalorder %s85, %s86
      %p97 = scmp.eq.s32.totalorder %s27, 0
      %p98 = por %p96, %p97
      %p99 = scmp.ne.s32.totalorder %s85, %s86
      %p100 = scmp.eq.s32.totalorder %s28, 1
      %p101 = por %p99, %p100
      %p103 = scmp.ne.s32.totalorder %s86, %s102
      %p104 = scmp.eq.s32.totalorder %s28, 0
      %p105 = por %p103, %p104
      %s106 = sadd.s32 %s29, %s30
      %p107 = scmp.lt.s32.totalorder %s106, 0
      %s108 = scalar_select %p107, %s106, 0
      %s109 = sadd.s32 %s41, %s37
      %p110 = scmp.lt.s32.totalorder %s109, 0
      %s111 = scalar_select %p110, %s109, 0
      %s112 = ssub.s32 %s108, %s111
      %p113 = scmp.eq.s32.totalorder %s112, 0
      %s115 = sadd.s32 %s114, 1
      %s116 = scalar_select %p113, %s114, %s115
      %p119 = pneg %p113
      %p120 = scmp.eq.s32.totalorder %s22, 1
      %p121 = por %p119, %p120
      %p122 = scmp.ne.s32.totalorder %s114, %s117
      %p123 = scmp.eq.s32.totalorder %s22, 0
      %p124 = por %p122, %p123
      %p125 = scmp.ne.s32.totalorder %s114, %s117
      %p126 = scmp.eq.s32.totalorder %s27, 1
      %p127 = por %p125, %p126
      %p128 = scmp.ne.s32.totalorder %s117, %s118
      %p129 = scmp.eq.s32.totalorder %s27, 0
      %p130 = por %p128, %p129
      %p131 = scmp.ne.s32.totalorder %s117, %s118
      %p132 = scmp.eq.s32.totalorder %s28, 1
      %p133 = por %p131, %p132
      %p135 = scmp.ne.s32.totalorder %s118, %s134
      %p136 = scmp.eq.s32.totalorder %s28, 0
      %p137 = por %p135, %p136
      %s138 = sadd.s32 %s29, %s30
      %p139 = scmp.lt.s32.totalorder %s138, 0
      %s140 = scalar_select %p139, %s138, 0
      %s141 = sadd.s32 %s41, %s37
      %p142 = scmp.lt.s32.totalorder %s141, 0
      %s143 = scalar_select %p142, %s141, 0
      %s144 = ssub.s32 %s140, %s143
      %p145 = scmp.eq.s32.totalorder %s144, 0
      %s147 = sadd.s32 %s146, 1
      %s148 = scalar_select %p145, %s146, %s147
      %p151 = pneg %p145
      %p152 = scmp.eq.s32.totalorder %s22, 1
      %p153 = por %p151, %p152
      %p154 = scmp.ne.s32.totalorder %s146, %s149
      %p155 = scmp.eq.s32.totalorder %s22, 0
      %p156 = por %p154, %p155
      %p157 = scmp.ne.s32.totalorder %s146, %s149
      %p158 = scmp.eq.s32.totalorder %s27, 1
      %p159 = por %p157, %p158
      %p160 = scmp.ne.s32.totalorder %s149, %s150
      %p161 = scmp.eq.s32.totalorder %s27, 0
      %p162 = por %p160, %p161
      %p163 = scmp.ne.s32.totalorder %s149, %s150
      %p164 = scmp.eq.s32.totalorder %s28, 1
      %p165 = por %p163, %p164
      %p167 = scmp.ne.s32.totalorder %s150, %s166
      %p168 = scmp.eq.s32.totalorder %s28, 0
      %p169 = por %p167, %p168
      %s170 = ssub.s32 %s29, %s41
      %p171 = scmp.eq.s32.totalorder %s170, 0
      %s173 = sadd.s32 %s172, 1
      %s174 = scalar_select %p171, %s172, %s173
      %p177 = pneg %p171
      %p178 = scmp.eq.s32.totalorder %s22, 1
      %p179 = por %p177, %p178
      %p180 = scmp.ne.s32.totalorder %s172, %s175
      %p181 = scmp.eq.s32.totalorder %s22, 0
      %p182 = por %p180, %p181
      %p183 = scmp.ne.s32.totalorder %s172, %s175
      %p184 = scmp.eq.s32.totalorder %s27, 1
      %p185 = por %p183, %p184
      %p186 = scmp.ne.s32.totalorder %s175, %s176
      %p187 = scmp.eq.s32.totalorder %s27, 0
      %p188 = por %p186, %p187
      %p189 = scmp.ne.s32.totalorder %s175, %s176
      %p190 = scmp.eq.s32.totalorder %s28, 1
      %p191 = por %p189, %p190
      %p193 = scmp.ne.s32.totalorder %s176, %s192
      %p194 = scmp.eq.s32.totalorder %s28, 0
      %p195 = por %p193, %p194
      %p196 = scmp.le.s32.totalorder 1, %s22
      %p197 = scmp.lt.s32.totalorder %s22, 3
      %p198 = pnand %p196, %p197
      %p199 = pneg %p198
      // Predicated region
      $region9: #{tpu_custom_call.1} parent=5 // pred_check
        _
      $region10: #{tpu_custom_call.1} parent=5 // pred_check_branch
        %201 = sbr.rel (%p198) target = $region12
      $region11: #{tpu_custom_call.1} parent=5 // pred_region
        %s202 = ssub.s32 %s22, 1
      $region12: #{tpu_custom_call.1} parent=5 // pred_fallthru
        _
      %p203 = scmp.lt.s32.totalorder %s22, 2
      // Predicated region
      $region13: #{tpu_custom_call.1} parent=5 // pred_check
        %p204 = pneg %p203
      $region14: #{tpu_custom_call.1} parent=5 // pred_check_branch
        %206 = sbr.rel (%p204) target = $region16
      $region15: #{tpu_custom_call.1} parent=5 // pred_region
        // Predicated region
        $region17: #{tpu_custom_call.1} parent=15 // pred_check
          %p207 = pneg %p60
        $region18: #{tpu_custom_call.1} parent=15 // pred_check_branch
          %209 = sbr.rel (%p207) target = $region20
        $region19: #{tpu_custom_call.1} parent=15 // pred_region
          %s210 = sand.u32 %s50, 1
          %s211 = scalar_lea.sflag [#allocation3], %s210
          %s212 = sand.u32 %s50, 1
          %s213 = smul.addr %s212, 32
          %s214 = scalar_lea.vmem [#allocation2], %s213
          %s215 = sadd.s32 %s29, %s30
          %p216 = scmp.lt.s32.totalorder %s215, 0
          %s217 = scalar_select %p216, %s215, 0
          %s218 = smul.u32 2, %s217
          %s219 = ssub.s32 1, %s218
          %s220 = smul.u32 64, %s219
          %s221 = smul.u32 %s220, 4
          %s223 = ssub.s32 512, %s221
          %224 = vsyncadd %s211, %s223
          %p225 = scmp.ne.s32.totalorder 0, %s221
          %s226 = smul.addr %s218, 4
          %s227 = smul.addr %s226, 64
          %s228 = scalar_lea.hbm %s0, %s227
          %s229 = smul.u32 16, %s219
          %s230 = sshll.u32 %s214, 4
          %s231 = int_to_ptr.vmem [resolvable:$true] %s230
          %s232 = sshll.u32 %s229, 4
          %236 = dma.hbm_to_vmem [thread:$0]  (%p225), %s228, %s232, %s231, %s211, 256, 256, 16
        $region20: #{tpu_custom_call.1} parent=15 // pred_fallthru
          _
        // Predicated region
        $region21: #{tpu_custom_call.1} parent=15 // pred_check
          %p237 = pneg %p92
        $region22: #{tpu_custom_call.1} parent=15 // pred_check_branch
          %239 = sbr.rel (%p237) target = $region24
        $region23: #{tpu_custom_call.1} parent=15 // pred_region
          %s240 = sand.u32 %s22, 1
          %s241 = scalar_lea.sflag [#allocation6], %s240
          %s242 = sand.u32 %s82, 1
          %s243 = smul.addr %s242, 32
          %s244 = scalar_lea.vmem [#allocation5], %s243
          %s245 = sadd.s32 %s29, %s30
          %p246 = scmp.lt.s32.totalorder %s245, 0
          %s247 = scalar_select %p246, %s245, 0
          %s248 = smul.u32 2, %s247
          %s249 = ssub.s32 1, %s248
          %s250 = smul.u32 64, %s249
          %s251 = smul.u32 %s250, 4
          %s253 = ssub.s32 512, %s251
          %254 = vsyncadd %s241, %s253
          %p255 = scmp.ne.s32.totalorder 0, %s251
          %s256 = smul.addr %s248, 4
          %s257 = smul.addr %s256, 64
          %s258 = scalar_lea.hbm %s1, %s257
          %s259 = smul.u32 16, %s249
          %s260 = sshll.u32 %s244, 4
          %s261 = int_to_ptr.vmem [resolvable:$true] %s260
          %s262 = sshll.u32 %s259, 4
          %266 = dma.hbm_to_vmem [thread:$0]  (%p255), %s258, %s262, %s261, %s241, 256, 256, 16
        $region24: #{tpu_custom_call.1} parent=15 // pred_fallthru
          _
        // Predicated region
        $region25: #{tpu_custom_call.1} parent=15 // pred_check
          %p267 = pneg %p124
        $region26: #{tpu_custom_call.1} parent=15 // pred_check_branch
          %269 = sbr.rel (%p267) target = $region28
        $region27: #{tpu_custom_call.1} parent=15 // pred_region
          %s270 = sand.u32 %s22, 1
          %s271 = scalar_lea.sflag [#allocation6], %s270
          %s272 = sand.u32 %s114, 1
          %s273 = smul.addr %s272, 32
          %s274 = scalar_lea.vmem [#allocation7], %s273
          %s275 = sadd.s32 %s29, %s30
          %p276 = scmp.lt.s32.totalorder %s275, 0
          %s277 = scalar_select %p276, %s275, 0
          %s278 = smul.u32 2, %s277
          %s279 = ssub.s32 1, %s278
          %s280 = smul.u32 64, %s279
          %s281 = smul.u32 %s280, 4
          %s283 = ssub.s32 512, %s281
          %284 = vsyncadd %s271, %s283
          %p285 = scmp.ne.s32.totalorder 0, %s281
          %s286 = smul.addr %s278, 4
          %s287 = smul.addr %s286, 64
          %s288 = scalar_lea.hbm %s2, %s287
          %s289 = smul.u32 16, %s279
          %s290 = sshll.u32 %s274, 4
          %s291 = int_to_ptr.vmem [resolvable:$true] %s290
          %s292 = sshll.u32 %s289, 4
          %296 = dma.hbm_to_vmem [thread:$0]  (%p285), %s288, %s292, %s291, %s271, 256, 256, 16
        $region28: #{tpu_custom_call.1} parent=15 // pred_fallthru
          _
        // Predicated region
        $region29: #{tpu_custom_call.1} parent=15 // pred_check
          %p297 = pneg %p156
        $region30: #{tpu_custom_call.1} parent=15 // pred_check_branch
          %299 = sbr.rel (%p297) target = $region32
        $region31: #{tpu_custom_call.1} parent=15 // pred_region
          %s300 = sand.u32 %s146, 1
          %s301 = scalar_lea.sflag [#allocation9], %s300
          %s302 = sand.u32 %s146, 1
          %s303 = smul.addr %s302, 32
          %s304 = scalar_lea.vmem [#allocation8], %s303
          %s305 = sadd.s32 %s29, %s30
          %p306 = scmp.lt.s32.totalorder %s305, 0
          %s307 = scalar_select %p306, %s305, 0
          %s308 = smul.u32 2, %s307
          %s309 = ssub.s32 1, %s308
          %s310 = smul.u32 64, %s309
          %s311 = smul.u32 %s310, 4
          %s313 = ssub.s32 512, %s311
          %314 = vsyncadd %s301, %s313
          %p315 = scmp.ne.s32.totalorder 0, %s311
          %s316 = smul.addr %s308, 4
          %s317 = smul.addr %s316, 64
          %s318 = scalar_lea.hbm %s3, %s317
          %s319 = smul.u32 16, %s309
          %s320 = sshll.u32 %s304, 4
          %s321 = int_to_ptr.vmem [resolvable:$true] %s320
          %s322 = sshll.u32 %s319, 4
          %326 = dma.hbm_to_vmem [thread:$0]  (%p315), %s318, %s322, %s321, %s301, 256, 256, 16
        $region32: #{tpu_custom_call.1} parent=15 // pred_fallthru
          _
      $region16: #{tpu_custom_call.1} parent=5 // pred_fallthru
        _
      %p327 = scmp.le.s32.totalorder 1, %s22
      %p328 = scmp.lt.s32.totalorder %s22, 3
      %p329 = pnand %p327, %p328
      %p330 = pneg %p329
      // Predicated region
      $region33: #{tpu_custom_call.1} parent=5 // pred_check
        _
      $region34: #{tpu_custom_call.1} parent=5 // pred_check_branch
        %332 = sbr.rel (%p329) target = $region36
      $region35: #{tpu_custom_call.1} parent=5 // pred_region
        %s333 = ssub.s32 %s22, 1
        %s334 = sand.u32 %s53, 1
        %s335 = scalar_lea.sflag [#allocation3], %s334
        %s336 = sand.u32 %s53, 1
        %s337 = smul.addr %s336, 32
        %s338 = scalar_lea.vmem [#allocation2], %s337
        // Predicated region
        $region37: #{tpu_custom_call.1} parent=35 // pred_check
          %p339 = pneg %p66
        $region38: #{tpu_custom_call.1} parent=35 // pred_check_branch
          %341 = sbr.rel (%p339) target = $region40
        $region39: #{tpu_custom_call.1} parent=35 // pred_region
          %342 = dma.done %s335, 512
        $region40: #{tpu_custom_call.1} parent=35 // pred_fallthru
          _
        %s343 = sand.u32 %s27, 1
        %s344 = scalar_lea.sflag [#allocation6], %s343
        %s345 = sand.u32 %s85, 1
        %s346 = smul.addr %s345, 32
        %s347 = scalar_lea.vmem [#allocation5], %s346
        // Predicated region
        $region41: #{tpu_custom_call.1} parent=35 // pred_check
          %p348 = pneg %p98
        $region42: #{tpu_custom_call.1} parent=35 // pred_check_branch
          %350 = sbr.rel (%p348) target = $region44
        $region43: #{tpu_custom_call.1} parent=35 // pred_region
          %351 = dma.done %s344, 512
        $region44: #{tpu_custom_call.1} parent=35 // pred_fallthru
          _
        %s352 = sand.u32 %s27, 1
        %s353 = scalar_lea.sflag [#allocation6], %s352
        %s354 = sand.u32 %s117, 1
        %s355 = smul.addr %s354, 32
        %s356 = scalar_lea.vmem [#allocation7], %s355
        // Predicated region
        $region45: #{tpu_custom_call.1} parent=35 // pred_check
          %p357 = pneg %p130
        $region46: #{tpu_custom_call.1} parent=35 // pred_check_branch
          %359 = sbr.rel (%p357) target = $region48
        $region47: #{tpu_custom_call.1} parent=35 // pred_region
          %360 = dma.done %s353, 512
        $region48: #{tpu_custom_call.1} parent=35 // pred_fallthru
          _
        %s361 = sand.u32 %s149, 1
        %s362 = scalar_lea.sflag [#allocation9], %s361
        %s363 = sand.u32 %s149, 1
        %s364 = smul.addr %s363, 32
        %s365 = scalar_lea.vmem [#allocation8], %s364
        // Predicated region
        $region49: #{tpu_custom_call.1} parent=35 // pred_check
          %p366 = pneg %p162
        $region50: #{tpu_custom_call.1} parent=35 // pred_check_branch
          %368 = sbr.rel (%p366) target = $region52
        $region51: #{tpu_custom_call.1} parent=35 // pred_region
          %369 = dma.done %s362, 512
        $region52: #{tpu_custom_call.1} parent=35 // pred_fallthru
          _
        %s370 = sand.u32 %s53, 1
        %s371 = scalar_lea.sflag [#allocation3], %s370
        %s372 = sand.u32 %s53, 1
        %s373 = smul.addr %s372, 32
        %s374 = scalar_lea.vmem [#allocation2], %s373
        %p375 = pneg %p66
        %p376 = pneg %p63
        %s377 = sand.u32 %s27, 1
        %s378 = scalar_lea.sflag [#allocation6], %s377
        %s379 = sand.u32 %s85, 1
        %s380 = smul.addr %s379, 32
        %s381 = scalar_lea.vmem [#allocation5], %s380
        %p382 = pneg %p98
        %p383 = pneg %p95
        %s384 = sand.u32 %s27, 1
        %s385 = scalar_lea.sflag [#allocation6], %s384
        %s386 = sand.u32 %s117, 1
        %s387 = smul.addr %s386, 32
        %s388 = scalar_lea.vmem [#allocation7], %s387
        %p389 = pneg %p130
        %p390 = pneg %p127
        %s391 = sand.u32 %s149, 1
        %s392 = scalar_lea.sflag [#allocation9], %s391
        %s393 = sand.u32 %s149, 1
        %s394 = smul.addr %s393, 32
        %s395 = scalar_lea.vmem [#allocation8], %s394
        %p396 = pneg %p162
        %p397 = pneg %p159
        %p398 = pneg %p188
        %p399 = pneg %p185
        %s400 = sand.u32 %s175, 1
        %s401 = scalar_lea.sflag [#allocation4], %s400
        %s402 = sand.u32 %s175, 1
        %s403 = smul.addr %s402, 96
        %s404 = scalar_lea.vmem [#allocation10], %s403
        %s405 = sadd.s32 %s31, %s32
        %p406 = scmp.lt.s32.totalorder %s405, 0
        %s407 = scalar_select %p406, %s405, 0
        %s408 = smul.u32 2, %s407
        %s409 = ssub.s32 1, %s408
        %s410 = smul.u32 64, %s409
        %s411 = smul.u32 %s410, 4
        %s412 = sadd.s32 %s31, %s32
        %p413 = scmp.lt.s32.totalorder %s412, 0
        %s414 = scalar_select %p413, %s412, 0
        %s415 = smul.u32 2, %s414
        %s416 = ssub.s32 1, %s415
        %s417 = smul.u32 64, %s416
        %s418 = smul.u32 %s417, 4
        %s419 = sadd.s32 %s31, %s32
        %p420 = scmp.lt.s32.totalorder %s419, 0
        %s421 = scalar_select %p420, %s419, 0
        %s422 = smul.u32 2, %s421
        %s423 = ssub.s32 1, %s422
        %s424 = smul.u32 64, %s423
        %s425 = smul.u32 %s424, 4
        %s426 = sadd.s32 %s31, %s32
        %p427 = scmp.lt.s32.totalorder %s426, 0
        %s428 = scalar_select %p427, %s426, 0
        %s429 = smul.u32 2, %s428
        %s430 = ssub.s32 1, %s429
        %s431 = smul.u32 64, %s430
        %s432 = smul.u32 %s431, 4
        %p433 = scmp.eq.s32.totalorder %s32, 0
        // Predicated region
        $region53: #{tpu_custom_call.1} parent=35 // pred_check
          %p434 = pneg %p433
        $region54: #{tpu_custom_call.1} parent=35 // pred_check_branch
          %436 = sbr.rel (%p434) target = $region56
        $region55: #{tpu_custom_call.1} parent=35 // pred_region
          %437 = vst [vmem:[%s404] sm:$0xff] 0.0
          %438 = vst [vmem:[%s404 + $0x8] sm:$0xff] 0.0
          %439 = vst [vmem:[%s404 + $0x10] sm:$0xff] 0.0
          %440 = vst [vmem:[%s404 + $0x18] sm:$0xff] 0.0
          %441 = vst [vmem:[%s404 + $0x20] sm:$0xff] 0.0
          %442 = vst [vmem:[%s404 + $0x28] sm:$0xff] 0.0
          %443 = vst [vmem:[%s404 + $0x30] sm:$0xff] 0.0
          %444 = vst [vmem:[%s404 + $0x38] sm:$0xff] 0.0
          %445 = vst [vmem:[%s404 + $0x40] sm:$0xff] 0.0
          %446 = vst [vmem:[%s404 + $0x48] sm:$0xff] 0.0
          %447 = vst [vmem:[%s404 + $0x50] sm:$0xff] 0.0
          %448 = vst [vmem:[%s404 + $0x58] sm:$0xff] 0.0
        $region56: #{tpu_custom_call.1} parent=35 // pred_fallthru
          _
        %v449 = vld [vmem:[%s338] sm:$0xff]
        %v450 = vld [vmem:[%s338 + $0x8] sm:$0xff]
        %v451 = vld [vmem:[%s338 + $0x10] sm:$0xff]
        %v452 = vld [vmem:[%s338 + $0x18] sm:$0xff]
        %s453 = sadd.s32 %s31, %s32
        %s454 = smul.u32 %s453, 8
        %v455 = vlaneseq
        %v456 = vshrl.u32 %v455, 7
        %v457 = vstv %s454
        %v458 = vadd.s32 %v456, %v457
        %vm459 = vcmp.lt.s32.totalorder %v458, 3
        %v460 = vld [vmem:[%s347] sm:$0xff]
        %v461 = vld [vmem:[%s347 + $0x8] sm:$0xff]
        %v462 = vld [vmem:[%s347 + $0x10] sm:$0xff]
        %v463 = vld [vmem:[%s347 + $0x18] sm:$0xff]
        %v464 = vsub.f32 %v460, %v449
        %v465 = vsub.f32 %v461, %v450
        %v466 = vsub.f32 %v462, %v451
        %v467 = vsub.f32 %v463, %v452
        %v472 = vcombine.low %v464, %v466
        %v473 = vcombine.high %v464, %v466
        %v474 = vcombine.low %v465, %v467
        %v475 = vcombine.high %v465, %v467
        %v480 = vsel %vm459, %v472, 0.0
        %v481 = vsel %vm459, %v473, 0.0
        %v482 = vsel %vm459, %v474, 0.0
        %v483 = vsel %vm459, %v475, 0.0
        %v484 = vmul.f32 %v480, %v480
        %v485 = vmul.f32 %v481, %v481
        %v486 = vmul.f32 %v482, %v482
        %v487 = vmul.f32 %v483, %v483
        %v488 = vld [vmem:[%s404] sm:$0xff]
        %v489 = vld [vmem:[%s404 + $0x8] sm:$0xff]
        %v490 = vld [vmem:[%s404 + $0x10] sm:$0xff]
        %v491 = vld [vmem:[%s404 + $0x18] sm:$0xff]
        %v492 = vadd.f32 %v484, 0.0
        %v493 = vadd.f32 %v485, 0.0
        %v494 = vadd.f32 %v486, 0.0
        %v495 = vadd.f32 %v487, 0.0
        %v496 = vadd.f32 %v488, %v492
        %v497 = vadd.f32 %v489, %v493
        %v498 = vadd.f32 %v490, %v494
        %v499 = vadd.f32 %v491, %v495
        %500 = vst [vmem:[%s404] sm:$0xff] %v496
        %501 = vst [vmem:[%s404 + $0x8] sm:$0xff] %v497
        %502 = vst [vmem:[%s404 + $0x10] sm:$0xff] %v498
        %503 = vst [vmem:[%s404 + $0x18] sm:$0xff] %v499
        %v504 = vld [vmem:[%s356] sm:$0xff]
        %v505 = vld [vmem:[%s356 + $0x8] sm:$0xff]
        %v506 = vld [vmem:[%s356 + $0x10] sm:$0xff]
        %v507 = vld [vmem:[%s356 + $0x18] sm:$0xff]
        %v508 = vsub.f32 %v504, %v449
        %v509 = vsub.f32 %v505, %v450
        %v510 = vsub.f32 %v506, %v451
        %v511 = vsub.f32 %v507, %v452
        %v516 = vcombine.low %v508, %v510
        %v517 = vcombine.high %v508, %v510
        %v518 = vcombine.low %v509, %v511
        %v519 = vcombine.high %v509, %v511
        %v524 = vsel %vm459, %v516, 0.0
        %v525 = vsel %vm459, %v517, 0.0
        %v526 = vsel %vm459, %v518, 0.0
        %v527 = vsel %vm459, %v519, 0.0
        %v528 = vmul.f32 %v524, %v524
        %v529 = vmul.f32 %v525, %v525
        %v530 = vmul.f32 %v526, %v526
        %v531 = vmul.f32 %v527, %v527
        %s532 = scalar_lea.vmem %s404, 32 [#allocation10]
        %v533 = vld [vmem:[%s532] sm:$0xff]
        %v534 = vld [vmem:[%s532 + $0x8] sm:$0xff]
        %v535 = vld [vmem:[%s532 + $0x10] sm:$0xff]
        %v536 = vld [vmem:[%s532 + $0x18] sm:$0xff]
        %v537 = vadd.f32 %v528, 0.0
        %v538 = vadd.f32 %v529, 0.0
        %v539 = vadd.f32 %v530, 0.0
        %v540 = vadd.f32 %v531, 0.0
        %v541 = vadd.f32 %v533, %v537
        %v542 = vadd.f32 %v534, %v538
        %v543 = vadd.f32 %v535, %v539
        %v544 = vadd.f32 %v536, %v540
        %545 = vst [vmem:[%s532] sm:$0xff] %v541
        %546 = vst [vmem:[%s532 + $0x8] sm:$0xff] %v542
        %547 = vst [vmem:[%s532 + $0x10] sm:$0xff] %v543
        %548 = vst [vmem:[%s532 + $0x18] sm:$0xff] %v544
        %v549 = vld [vmem:[%s365] sm:$0xff]
        %v550 = vld [vmem:[%s365 + $0x8] sm:$0xff]
        %v551 = vld [vmem:[%s365 + $0x10] sm:$0xff]
        %v552 = vld [vmem:[%s365 + $0x18] sm:$0xff]
        %v553 = vsub.f32 %v549, %v449
        %v554 = vsub.f32 %v550, %v450
        %v555 = vsub.f32 %v551, %v451
        %v556 = vsub.f32 %v552, %v452
        %v561 = vcombine.low %v553, %v555
        %v562 = vcombine.high %v553, %v555
        %v563 = vcombine.low %v554, %v556
        %v564 = vcombine.high %v554, %v556
        %v569 = vsel %vm459, %v561, 0.0
        %v570 = vsel %vm459, %v562, 0.0
        %v571 = vsel %vm459, %v563, 0.0
        %v572 = vsel %vm459, %v564, 0.0
        %v573 = vmul.f32 %v569, %v569
        %v574 = vmul.f32 %v570, %v570
        %v575 = vmul.f32 %v571, %v571
        %v576 = vmul.f32 %v572, %v572
        %s577 = scalar_lea.vmem %s404, 64 [#allocation10]
        %v578 = vld [vmem:[%s577] sm:$0xff]
        %v579 = vld [vmem:[%s577 + $0x8] sm:$0xff]
        %v580 = vld [vmem:[%s577 + $0x10] sm:$0xff]
        %v581 = vld [vmem:[%s577 + $0x18] sm:$0xff]
        %v582 = vadd.f32 %v573, 0.0
        %v583 = vadd.f32 %v574, 0.0
        %v584 = vadd.f32 %v575, 0.0
        %v585 = vadd.f32 %v576, 0.0
        %v586 = vadd.f32 %v578, %v582
        %v587 = vadd.f32 %v579, %v583
        %v588 = vadd.f32 %v580, %v584
        %v589 = vadd.f32 %v581, %v585
        %590 = vst [vmem:[%s577] sm:$0xff] %v586
        %591 = vst [vmem:[%s577 + $0x8] sm:$0xff] %v587
        %592 = vst [vmem:[%s577 + $0x10] sm:$0xff] %v588
        %593 = vst [vmem:[%s577 + $0x18] sm:$0xff] %v589
        %s594 = sand.u32 %s175, 1
        %s595 = scalar_lea.sflag [#allocation4], %s594
        %s596 = sand.u32 %s175, 1
        %s597 = smul.addr %s596, 96
        %s598 = scalar_lea.vmem [#allocation10], %s597
        // Predicated region
        $region57: #{tpu_custom_call.1} parent=35 // pred_check
          %p599 = pneg %p185
        $region58: #{tpu_custom_call.1} parent=35 // pred_check_branch
          %601 = sbr.rel (%p599) target = $region60
        $region59: #{tpu_custom_call.1} parent=35 // pred_region
          %s603 = ssub.s32 1536, 1536
          %604 = vsyncadd %s595, %s603
          %s605 = smul.addr %s31, 12
          %s606 = smul.addr %s605, 128
          %s607 = scalar_lea.hbm %s4, %s606
          %s608 = sshll.u32 %s598, 4
          %s609 = int_to_ptr.vmem [resolvable:$true] %s608
          %614 = dma.vmem_to_hbm [thread:$0]  %s609, 1536, %s607, %s595, 512, 512, 32
        $region60: #{tpu_custom_call.1} parent=35 // pred_fallthru
          _
      $region36: #{tpu_custom_call.1} parent=5 // pred_fallthru
        _
      %p615 = scmp.le.s32.totalorder 2, %s22
      // Predicated region
      $region61: #{tpu_custom_call.1} parent=5 // pred_check
        %p616 = pneg %p615
      $region62: #{tpu_custom_call.1} parent=5 // pred_check_branch
        %618 = sbr.rel (%p616) target = $region64
      $region63: #{tpu_custom_call.1} parent=5 // pred_region
        %s619 = ssub.s32 %s22, 2
        // Predicated region
        $region65: #{tpu_custom_call.1} parent=63 // pred_check
          %p620 = pneg %p191
        $region66: #{tpu_custom_call.1} parent=63 // pred_check_branch
          %622 = sbr.rel (%p620) target = $region68
        $region67: #{tpu_custom_call.1} parent=63 // pred_region
          %s623 = sand.u32 %s176, 1
          %s624 = scalar_lea.sflag [#allocation4], %s623
          %s625 = sand.u32 %s176, 1
          %s626 = smul.addr %s625, 96
          %s627 = scalar_lea.vmem [#allocation10], %s626
          %628 = dma.done %s624, 1536
        $region68: #{tpu_custom_call.1} parent=63 // pred_fallthru
          _
      $region64: #{tpu_custom_call.1} parent=5 // pred_fallthru
        _
    $region6: #{tpu_custom_call.1} parent=1 // loop_footer
      %s26 = sadd.s32 1, %s22
    $region7: #{tpu_custom_call.1} parent=1 // loop_footer_branch
      %21 = sbr.rel target = $region3
    $region8: #{tpu_custom_call.1} parent=1 // loop_exit
      _
    %629 = vsyncpa [#allocation3], 1
    %s630 = scalar_lea.sflag [#allocation3], 1
    %631 = vsyncpa %s630, 1
    %632 = vsyncpa [#allocation6], 1
    %s633 = scalar_lea.sflag [#allocation6], 1
    %634 = vsyncpa %s633, 1
    %635 = vsyncpa [#allocation9], 1
    %s636 = scalar_lea.sflag [#allocation9], 1
    %637 = vsyncpa %s636, 1
    %638 = vsyncpa [#allocation4], 1
    %s639 = scalar_lea.sflag [#allocation4], 1
    %640 = vsyncpa %s639, 1

</llo_original>
